<compile_context>
chip_gen: v7x
topology: tpu7x:2x2x1
jax: 0.10.0
libtpu: 0.0.40
codegen_flags: <defaults>
</compile_context>

<pallas_src>
import jax
import jax.numpy as jnp
import numpy as np
from jax import lax
from jax.experimental import pallas as pl
from jax.experimental.pallas import tpu as pltpu

EMBED_SIZE = 32      # small stand-in for embedSize=300 (padded to 128 in-kernel)
NUM_CLASSES = 2
VOCAB_SIZE = 16
LANE = 128
SUB = 8


def _round_up(x, m):
    return (x + m - 1) // m * m


def renn_kernel(left_ref, right_ref, lstart_ref, lsize_ref,        # SMEM int32
                leaf_ref, wl_ref, wr_ref, bw_ref, pt_ref, bp_ref,  # VMEM f32
                out_ref,                                           # VMEM (Np, Cp)
                h_scratch, hl_buf, hr_buf):                        # VMEM scratch
    n_levels = lstart_ref.shape[0]     # static
    mmax = hl_buf.shape[0]             # static, multiple of 8

    # ---- leaves: one vectorized normalize of the pre-gathered embeddings ----
    # (non-leaf rows hold placeholder data and are overwritten before any read)
    h0 = leaf_ref[...]
    h_scratch[...] = h0 * lax.rsqrt(jnp.sum(h0 * h0, axis=-1, keepdims=True))

    hl_buf[...] = jnp.zeros_like(hl_buf)
    hr_buf[...] = jnp.zeros_like(hr_buf)

    # ---- internal levels: gather children rows, one batched MXU matmul ------
    def level_body(l, carry):
        start = lstart_ref[l]          # first h_scratch row of this level
        size = lsize_ref[l]            # number of real nodes in this level

        def gather(m, c):
            j = start + m
            hl_buf[pl.ds(m, 1), :] = h_scratch[pl.ds(left_ref[j], 1), :]
            hr_buf[pl.ds(m, 1), :] = h_scratch[pl.ds(right_ref[j], 1), :]
            return c

        lax.fori_loop(0, size, gather, 0)

        # tanh(W [h_l ; h_r] + b) as two (mmax,Ep)x(Ep,Ep) dots, f32 accumulate
        h = jnp.tanh(
            jnp.dot(hl_buf[...], wl_ref[...], preferred_element_type=jnp.float32)
            + jnp.dot(hr_buf[...], wr_ref[...], preferred_element_type=jnp.float32)
            + bw_ref[...])
        h = h * lax.rsqrt(jnp.sum(h * h, axis=-1, keepdims=True))
        # Whole-slab store: rows beyond `size` land only in not-yet-computed
        # rows of later levels or in padding, and are overwritten / sliced off.
        h_scratch[pl.ds(start, mmax), :] = h
        return carry

    lax.fori_loop(0, n_levels, level_body, 0, unroll=2)

    # ---- epilogue: one batched projection for every node --------------------
    out_ref[...] = (jnp.dot(h_scratch[...], pt_ref[...],
                            preferred_element_type=jnp.float32) + bp_ref[...])


def recursive_nn_forward(is_leaf, word_idx, left_idx, right_idx,
                         emb, W_weight, W_bias, P_weight, P_bias):
    """Runs the Pallas kernel. Returns (num_nodes, num_classes) post-order logits."""
    is_leaf_np = np.asarray(is_leaf)
    word_np = np.asarray(word_idx)
    left_np = np.asarray(left_idx)
    right_np = np.asarray(right_idx)
    n = int(is_leaf_np.shape[0])

    # ---- host: post-order -> level-order wavefronts (index plumbing only) ---
    lvl = np.zeros(n, np.int64)
    for i in range(n):
        if is_leaf_np[i] == 0:
            assert left_np[i] < i and right_np[i] < i, "input must be post-order"
            lvl[i] = 1 + max(lvl[left_np[i]], lvl[right_np[i]])
    order = np.argsort(lvl, kind="stable")               # new row -> old node
    old_to_new = np.empty(n, np.int64)
    old_to_new[order] = np.arange(n)
    n_leaves = int((lvl == 0).sum())
    n_levels = max(int(lvl.max()), 1)
    sizes = [int((lvl == l).sum()) for l in range(1, n_levels + 1)]
    starts, s = [], n_leaves
    for sz in sizes:
        starts.append(s)
        s += sz
    mmax = _round_up(max(sizes + [1]), SUB)               # static batched-matmul M
    Np = _round_up(n + mmax, SUB)                         # rows incl. overshoot pad

    left_rows = np.zeros(Np, np.int32)
    right_rows = np.zeros(Np, np.int32)
    word_new = np.zeros(Np, np.int64)
    for new_r, old_i in enumerate(order):
        if is_leaf_np[old_i]:
            word_new[new_r] = word_np[old_i]
        else:
            left_rows[new_r] = old_to_new[left_np[old_i]]
            right_rows[new_r] = old_to_new[right_np[old_i]]

    # ---- parameter plumbing: zero-pad to lane multiples (f32 at demo scale) -
    V, E = emb.shape
    C = P_weight.shape[0]
    Ep = _round_up(E, LANE)
    Cp = _round_up(C, LANE)
    f32 = jnp.float32
    emb_p = jnp.zeros((V, Ep), f32).at[:, :E].set(jnp.asarray(emb, f32))
    wt = jnp.asarray(W_weight, f32).T                     # (2E, E)
    wl = jnp.zeros((Ep, Ep), f32).at[:E, :E].set(wt[:E])  # left-child weight
    wr = jnp.zeros((Ep, Ep), f32).at[:E, :E].set(wt[E:])  # right-child weight
    bw = jnp.zeros((1, Ep), f32).at[0, :E].set(jnp.asarray(W_bias, f32))
    pt = jnp.zeros((Ep, Cp), f32).at[:E, :C].set(jnp.asarray(P_weight, f32).T)
    bp = jnp.zeros((1, Cp), f32).at[0, :C].set(jnp.asarray(P_bias, f32))
    # Pre-gathered (level-order) leaf embeddings: only the gathered rows, not
    # the full table, enter VMEM. Non-leaf rows carry emb[0] and are never read.
    leaf_h = jnp.take(emb_p, jnp.asarray(word_new, jnp.int32), axis=0)  # (Np, Ep)

    smem = pl.BlockSpec(memory_space=pltpu.MemorySpace.SMEM)
    vmem = pl.BlockSpec(memory_space=pltpu.MemorySpace.VMEM)

    # explicit VMEM budget: ~1.5x of the actual footprint, capped well below
    # physical (64 MiB on v7x, 128 MiB on v5e/v6e).
    param_bytes = 4 * (Np * Ep + 2 * Ep * Ep + Ep + Ep * Cp + Cp)
    scratch_bytes = 4 * (Np * Ep + 2 * mmax * Ep)
    out_bytes = 4 * Np * Cp
    vmem_limit = int(min(max(int(1.5 * (param_bytes + scratch_bytes + out_bytes)),
                             4 << 20), 48 << 20))

    out = pl.pallas_call(
        renn_kernel,
        out_shape=jax.ShapeDtypeStruct((Np, Cp), jnp.float32),
        in_specs=[smem, smem, smem, smem, vmem, vmem, vmem, vmem, vmem, vmem],
        out_specs=vmem,
        scratch_shapes=[pltpu.VMEM((Np, Ep), jnp.float32),     # node hidden states
                        pltpu.VMEM((mmax, Ep), jnp.float32),   # gathered left kids
                        pltpu.VMEM((mmax, Ep), jnp.float32)],  # gathered right kids
        compiler_params=pltpu.CompilerParams(vmem_limit_bytes=vmem_limit),
    )(jnp.asarray(left_rows, jnp.int32), jnp.asarray(right_rows, jnp.int32),
      jnp.asarray(starts, jnp.int32), jnp.asarray(sizes, jnp.int32),
      leaf_h, wl, wr, bw, pt, bp)

    # back to original post-order (== torch.cat(nodeProbList) order), drop pad
    return out[jnp.asarray(old_to_new, jnp.int32)][:, :C]


def ref_forward(is_leaf, word_idx, left_idx, right_idx, emb, W, bW, P, bP):
    """Pure numpy reference mirroring RecursiveNN.traverse / forward."""
    hs, outs = [], []
    for i in range(is_leaf.shape[0]):
        if int(is_leaf[i]) == 1:
            h = emb[int(word_idx[i])][None, :]
        else:
            cat = np.concatenate([hs[int(left_idx[i])], hs[int(right_idx[i])]], axis=1)
            h = np.tanh(cat @ W.T + bW[None, :])
        h = h / np.linalg.norm(h)
        hs.append(h)
        outs.append(h @ P.T + bP[None, :])
    return np.concatenate(outs, axis=0)


if __name__ == "__main__":
    key = jax.random.PRNGKey(0)
    k1, k2, k3, k4, k5 = jax.random.split(key, 5)

    # deterministic synthetic parameters (shapes from __init__)
    emb = jax.random.normal(k1, (VOCAB_SIZE, EMBED_SIZE), jnp.float32)
    W_weight = jax.random.normal(k2, (EMBED_SIZE, 2 * EMBED_SIZE), jnp.float32) * 0.1
    W_bias = jax.random.normal(k3, (EMBED_SIZE,), jnp.float32) * 0.1
    P_weight = jax.random.normal(k4, (NUM_CLASSES, EMBED_SIZE), jnp.float32) * 0.1
    P_bias = jax.random.normal(k5, (NUM_CLASSES,), jnp.float32) * 0.1

    # Example tree in post-order: leaves L0 L1 (-> I2), leaves L3 L4 (-> I5), root I6.
    is_leaf   = jnp.array([1, 1, 0, 1, 1,  0, 0], jnp.int32)
    word_idx  = jnp.array([3, 7, 0, 1, 12, 0, 0], jnp.int32)
    left_idx  = jnp.array([0, 0, 0, 0, 0,  3, 2], jnp.int32)
    right_idx = jnp.array([0, 0, 1, 0, 0,  4, 5], jnp.int32)

    out = recursive_nn_forward(is_leaf, word_idx, left_idx, right_idx,
                               emb, W_weight, W_bias, P_weight, P_bias)
    out = jax.block_until_ready(out)

    ref = ref_forward(np.array(is_leaf), np.array(word_idx), np.array(left_idx),
                      np.array(right_idx), np.array(emb), np.array(W_weight),
                      np.array(W_bias), np.array(P_weight), np.array(P_bias))

    assert out.shape == (7, NUM_CLASSES)
    np.testing.assert_allclose(np.array(out), ref, rtol=5e-3, atol=5e-3)
    print("KERNEL_OK")
</pallas_src>

<mosaic_0001>
module attributes {stable_mosaic.version = 11 : i64} {
  func.func @renn_kernel(%arg0: memref<16xi32, #tpu.memory_space<smem>>, %arg1: memref<16xi32, #tpu.memory_space<smem>>, %arg2: memref<2xi32, #tpu.memory_space<smem>>, %arg3: memref<2xi32, #tpu.memory_space<smem>>, %arg4: memref<16x128xf32, #tpu.memory_space<vmem>>, %arg5: memref<128x128xf32, #tpu.memory_space<vmem>>, %arg6: memref<128x128xf32, #tpu.memory_space<vmem>>, %arg7: memref<1x128xf32, #tpu.memory_space<vmem>>, %arg8: memref<128x128xf32, #tpu.memory_space<vmem>>, %arg9: memref<1x128xf32, #tpu.memory_space<vmem>>, %arg10: memref<16x128xf32, #tpu.memory_space<vmem>>, %arg11: memref<16x128xf32, #tpu.memory_space<vmem>>, %arg12: memref<8x128xf32, #tpu.memory_space<vmem>>, %arg13: memref<8x128xf32, #tpu.memory_space<vmem>>) attributes {dimension_semantics = [], scalar_prefetch = 0 : i64, scratch_operands = 3 : i64, tpu.core_type = #tpu.core_type<tc>} {
    %c0 = arith.constant 0 : index
    %c0_0 = arith.constant 0 : index
    %0 = vector.load %arg4[%c0, %c0_0] : memref<16x128xf32, #tpu.memory_space<vmem>>, vector<16x128xf32>
    %1 = arith.mulf %0, %0 : vector<16x128xf32>
    %cst = arith.constant dense<0.000000e+00> : vector<16xf32>
    %2 = vector.multi_reduction <add>, %1, %cst [1] : vector<16x128xf32> to vector<16xf32>
    %3 = vector.shape_cast %2 : vector<16xf32> to vector<16x1xf32>
    %4 = math.rsqrt %3 : vector<16x1xf32>
    %5 = vector.broadcast %4 : vector<16x1xf32> to vector<16x128xf32>
    %6 = arith.mulf %0, %5 : vector<16x128xf32>
    %c0_1 = arith.constant 0 : index
    %c0_2 = arith.constant 0 : index
    %7 = vector.load %arg11[%c0_1, %c0_2] : memref<16x128xf32, #tpu.memory_space<vmem>>, vector<16x128xf32>
    tpu.vector_store %arg11[%c0_1, %c0_2], %6 {strides = array<i32>} : memref<16x128xf32, #tpu.memory_space<vmem>>, vector<16x128xf32>,
    %cst_3 = arith.constant 0.000000e+00 : f32
    %8 = vector.broadcast %cst_3 : f32 to vector<8x128xf32>
    %c0_4 = arith.constant 0 : index
    %c0_5 = arith.constant 0 : index
    %9 = vector.load %arg12[%c0_4, %c0_5] : memref<8x128xf32, #tpu.memory_space<vmem>>, vector<8x128xf32>
    tpu.vector_store %arg12[%c0_4, %c0_5], %8 {strides = array<i32>} : memref<8x128xf32, #tpu.memory_space<vmem>>, vector<8x128xf32>,
    %cst_6 = arith.constant 0.000000e+00 : f32
    %10 = vector.broadcast %cst_6 : f32 to vector<8x128xf32>
    %c0_7 = arith.constant 0 : index
    %c0_8 = arith.constant 0 : index
    %11 = vector.load %arg13[%c0_7, %c0_8] : memref<8x128xf32, #tpu.memory_space<vmem>>, vector<8x128xf32>
    tpu.vector_store %arg13[%c0_7, %c0_8], %10 {strides = array<i32>} : memref<8x128xf32, #tpu.memory_space<vmem>>, vector<8x128xf32>,
    %c0_i32 = arith.constant 0 : i32
    %12 = arith.index_cast %c0_i32 : i32 to index
    %13 = memref.load %arg2[%12] : memref<2xi32, #tpu.memory_space<smem>>
    %14 = arith.index_cast %c0_i32 : i32 to index
    %15 = memref.load %arg3[%14] : memref<2xi32, #tpu.memory_space<smem>>
    %c0_i32_9 = arith.constant 0 : i32
    %c0_i32_10 = arith.constant 0 : i32
    %16 = arith.subi %15, %c0_i32_10 : i32
    %17 = arith.addi %c0_i32_10, %16 : i32
    %c1_i32 = arith.constant 1 : i32
    scf.for %arg14 = %c0_i32_10 to %17 step %c1_i32  : i32 {
      %69 = arith.addi %13, %arg14 : i32
      %70 = arith.index_cast %69 : i32 to index
      %71 = memref.load %arg0[%70] : memref<16xi32, #tpu.memory_space<smem>>
      %72 = arith.index_cast %71 : i32 to index
      %c0_52 = arith.constant 0 : index
      %73 = vector.load %arg11[%72, %c0_52] : memref<16x128xf32, #tpu.memory_space<vmem>>, vector<1x128xf32>
      %74 = arith.index_cast %arg14 : i32 to index
      %c0_53 = arith.constant 0 : index
      %75 = vector.load %arg12[%74, %c0_53] : memref<8x128xf32, #tpu.memory_space<vmem>>, vector<1x128xf32>
      tpu.vector_store %arg12[%74, %c0_53], %73 {strides = array<i32>} : memref<8x128xf32, #tpu.memory_space<vmem>>, vector<1x128xf32>,
      %76 = arith.index_cast %69 : i32 to index
      %77 = memref.load %arg1[%76] : memref<16xi32, #tpu.memory_space<smem>>
      %78 = arith.index_cast %77 : i32 to index
      %c0_54 = arith.constant 0 : index
      %79 = vector.load %arg11[%78, %c0_54] : memref<16x128xf32, #tpu.memory_space<vmem>>, vector<1x128xf32>
      %80 = arith.index_cast %arg14 : i32 to index
      %c0_55 = arith.constant 0 : index
      %81 = vector.load %arg13[%80, %c0_55] : memref<8x128xf32, #tpu.memory_space<vmem>>, vector<1x128xf32>
      tpu.vector_store %arg13[%80, %c0_55], %79 {strides = array<i32>} : memref<8x128xf32, #tpu.memory_space<vmem>>, vector<1x128xf32>,
    }
    %c0_11 = arith.constant 0 : index
    %c0_12 = arith.constant 0 : index
    %18 = vector.load %arg12[%c0_11, %c0_12] : memref<8x128xf32, #tpu.memory_space<vmem>>, vector<8x128xf32>
    %c0_13 = arith.constant 0 : index
    %c0_14 = arith.constant 0 : index
    %19 = vector.load %arg5[%c0_13, %c0_14] : memref<128x128xf32, #tpu.memory_space<vmem>>, vector<128x128xf32>
    %cst_15 = arith.constant dense<0.000000e+00> : vector<8x128xf32>
    %20 = tpu.matmul %18, %19, %cst_15 {dimension_numbers = #tpu.dot_dimension_numbers<[1], [0], [0], [1], [0, 0, 1, 1], [], []>} : vector<8x128xf32>, vector<128x128xf32>, vector<8x128xf32> -> vector<8x128xf32>
    %c0_16 = arith.constant 0 : index
    %c0_17 = arith.constant 0 : index
    %21 = vector.load %arg13[%c0_16, %c0_17] : memref<8x128xf32, #tpu.memory_space<vmem>>, vector<8x128xf32>
    %c0_18 = arith.constant 0 : index
    %c0_19 = arith.constant 0 : index
    %22 = vector.load %arg6[%c0_18, %c0_19] : memref<128x128xf32, #tpu.memory_space<vmem>>, vector<128x128xf32>
    %cst_20 = arith.constant dense<0.000000e+00> : vector<8x128xf32>
    %23 = tpu.matmul %21, %22, %cst_20 {dimension_numbers = #tpu.dot_dimension_numbers<[1], [0], [0], [1], [0, 0, 1, 1], [], []>} : vector<8x128xf32>, vector<128x128xf32>, vector<8x128xf32> -> vector<8x128xf32>
    %24 = arith.addf %20, %23 : vector<8x128xf32>
    %c0_21 = arith.constant 0 : index
    %c0_22 = arith.constant 0 : index
    %25 = vector.load %arg7[%c0_21, %c0_22] : memref<1x128xf32, #tpu.memory_space<vmem>>, vector<1x128xf32>
    %26 = vector.broadcast %25 : vector<1x128xf32> to vector<8x128xf32>
    %27 = arith.addf %24, %26 : vector<8x128xf32>
    %28 = math.tanh %27 : vector<8x128xf32>
    %29 = arith.mulf %28, %28 : vector<8x128xf32>
    %cst_23 = arith.constant dense<0.000000e+00> : vector<8xf32>
    %30 = vector.multi_reduction <add>, %29, %cst_23 [1] : vector<8x128xf32> to vector<8xf32>
    %31 = vector.shape_cast %30 : vector<8xf32> to vector<8x1xf32>
    %32 = math.rsqrt %31 : vector<8x1xf32>
    %33 = vector.broadcast %32 : vector<8x1xf32> to vector<8x128xf32>
    %34 = arith.mulf %28, %33 : vector<8x128xf32>
    %35 = arith.index_cast %13 : i32 to index
    %c0_24 = arith.constant 0 : index
    %36 = vector.load %arg11[%35, %c0_24] : memref<16x128xf32, #tpu.memory_space<vmem>>, vector<8x128xf32>
    tpu.vector_store %arg11[%35, %c0_24], %34 {strides = array<i32>} : memref<16x128xf32, #tpu.memory_space<vmem>>, vector<8x128xf32>,
    %c1_i32_25 = arith.constant 1 : i32
    %37 = arith.index_cast %c1_i32_25 : i32 to index
    %38 = memref.load %arg2[%37] : memref<2xi32, #tpu.memory_space<smem>>
    %39 = arith.index_cast %c1_i32_25 : i32 to index
    %40 = memref.load %arg3[%39] : memref<2xi32, #tpu.memory_space<smem>>
    %c0_i32_26 = arith.constant 0 : i32
    %c0_i32_27 = arith.constant 0 : i32
    %41 = arith.subi %40, %c0_i32_27 : i32
    %42 = arith.addi %c0_i32_27, %41 : i32
    %c1_i32_28 = arith.constant 1 : i32
    scf.for %arg14 = %c0_i32_27 to %42 step %c1_i32_28  : i32 {
      %69 = arith.addi %38, %arg14 : i32
      %70 = arith.index_cast %69 : i32 to index
      %71 = memref.load %arg0[%70] : memref<16xi32, #tpu.memory_space<smem>>
      %72 = arith.index_cast %71 : i32 to index
      %c0_52 = arith.constant 0 : index
      %73 = vector.load %arg11[%72, %c0_52] : memref<16x128xf32, #tpu.memory_space<vmem>>, vector<1x128xf32>
      %74 = arith.index_cast %arg14 : i32 to index
      %c0_53 = arith.constant 0 : index
      %75 = vector.load %arg12[%74, %c0_53] : memref<8x128xf32, #tpu.memory_space<vmem>>, vector<1x128xf32>
      tpu.vector_store %arg12[%74, %c0_53], %73 {strides = array<i32>} : memref<8x128xf32, #tpu.memory_space<vmem>>, vector<1x128xf32>,
      %76 = arith.index_cast %69 : i32 to index
      %77 = memref.load %arg1[%76] : memref<16xi32, #tpu.memory_space<smem>>
      %78 = arith.index_cast %77 : i32 to index
      %c0_54 = arith.constant 0 : index
      %79 = vector.load %arg11[%78, %c0_54] : memref<16x128xf32, #tpu.memory_space<vmem>>, vector<1x128xf32>
      %80 = arith.index_cast %arg14 : i32 to index
      %c0_55 = arith.constant 0 : index
      %81 = vector.load %arg13[%80, %c0_55] : memref<8x128xf32, #tpu.memory_space<vmem>>, vector<1x128xf32>
      tpu.vector_store %arg13[%80, %c0_55], %79 {strides = array<i32>} : memref<8x128xf32, #tpu.memory_space<vmem>>, vector<1x128xf32>,
    }
    %c0_29 = arith.constant 0 : index
    %c0_30 = arith.constant 0 : index
    %43 = vector.load %arg12[%c0_29, %c0_30] : memref<8x128xf32, #tpu.memory_space<vmem>>, vector<8x128xf32>
    %c0_31 = arith.constant 0 : index
    %c0_32 = arith.constant 0 : index
    %44 = vector.load %arg5[%c0_31, %c0_32] : memref<128x128xf32, #tpu.memory_space<vmem>>, vector<128x128xf32>
    %cst_33 = arith.constant dense<0.000000e+00> : vector<8x128xf32>
    %45 = tpu.matmul %43, %44, %cst_33 {dimension_numbers = #tpu.dot_dimension_numbers<[1], [0], [0], [1], [0, 0, 1, 1], [], []>} : vector<8x128xf32>, vector<128x128xf32>, vector<8x128xf32> -> vector<8x128xf32>
    %c0_34 = arith.constant 0 : index
    %c0_35 = arith.constant 0 : index
    %46 = vector.load %arg13[%c0_34, %c0_35] : memref<8x128xf32, #tpu.memory_space<vmem>>, vector<8x128xf32>
    %c0_36 = arith.constant 0 : index
    %c0_37 = arith.constant 0 : index
    %47 = vector.load %arg6[%c0_36, %c0_37] : memref<128x128xf32, #tpu.memory_space<vmem>>, vector<128x128xf32>
    %cst_38 = arith.constant dense<0.000000e+00> : vector<8x128xf32>
    %48 = tpu.matmul %46, %47, %cst_38 {dimension_numbers = #tpu.dot_dimension_numbers<[1], [0], [0], [1], [0, 0, 1, 1], [], []>} : vector<8x128xf32>, vector<128x128xf32>, vector<8x128xf32> -> vector<8x128xf32>
    %49 = arith.addf %45, %48 : vector<8x128xf32>
    %c0_39 = arith.constant 0 : index
    %c0_40 = arith.constant 0 : index
    %50 = vector.load %arg7[%c0_39, %c0_40] : memref<1x128xf32, #tpu.memory_space<vmem>>, vector<1x128xf32>
    %51 = vector.broadcast %50 : vector<1x128xf32> to vector<8x128xf32>
    %52 = arith.addf %49, %51 : vector<8x128xf32>
    %53 = math.tanh %52 : vector<8x128xf32>
    %54 = arith.mulf %53, %53 : vector<8x128xf32>
    %cst_41 = arith.constant dense<0.000000e+00> : vector<8xf32>
    %55 = vector.multi_reduction <add>, %54, %cst_41 [1] : vector<8x128xf32> to vector<8xf32>
    %56 = vector.shape_cast %55 : vector<8xf32> to vector<8x1xf32>
    %57 = math.rsqrt %56 : vector<8x1xf32>
    %58 = vector.broadcast %57 : vector<8x1xf32> to vector<8x128xf32>
    %59 = arith.mulf %53, %58 : vector<8x128xf32>
    %60 = arith.index_cast %38 : i32 to index
    %c0_42 = arith.constant 0 : index
    %61 = vector.load %arg11[%60, %c0_42] : memref<16x128xf32, #tpu.memory_space<vmem>>, vector<8x128xf32>
    tpu.vector_store %arg11[%60, %c0_42], %59 {strides = array<i32>} : memref<16x128xf32, #tpu.memory_space<vmem>>, vector<8x128xf32>,
    %c2_i32 = arith.constant 2 : i32
    %c0_43 = arith.constant 0 : index
    %c0_44 = arith.constant 0 : index
    %62 = vector.load %arg11[%c0_43, %c0_44] : memref<16x128xf32, #tpu.memory_space<vmem>>, vector<16x128xf32>
    %c0_45 = arith.constant 0 : index
    %c0_46 = arith.constant 0 : index
    %63 = vector.load %arg8[%c0_45, %c0_46] : memref<128x128xf32, #tpu.memory_space<vmem>>, vector<128x128xf32>
    %cst_47 = arith.constant dense<0.000000e+00> : vector<16x128xf32>
    %64 = tpu.matmul %62, %63, %cst_47 {dimension_numbers = #tpu.dot_dimension_numbers<[1], [0], [0], [1], [0, 0, 1, 1], [], []>} : vector<16x128xf32>, vector<128x128xf32>, vector<16x128xf32> -> vector<16x128xf32>
    %c0_48 = arith.constant 0 : index
    %c0_49 = arith.constant 0 : index
    %65 = vector.load %arg9[%c0_48, %c0_49] : memref<1x128xf32, #tpu.memory_space<vmem>>, vector<1x128xf32>
    %66 = vector.broadcast %65 : vector<1x128xf32> to vector<16x128xf32>
    %67 = arith.addf %64, %66 : vector<16x128xf32>
    %c0_50 = arith.constant 0 : index
    %c0_51 = arith.constant 0 : index
    %68 = vector.load %arg10[%c0_50, %c0_51] : memref<16x128xf32, #tpu.memory_space<vmem>>, vector<16x128xf32>
    tpu.vector_store %arg10[%c0_50, %c0_51], %67 {strides = array<i32>} : memref<16x128xf32, #tpu.memory_space<vmem>>, vector<16x128xf32>,
    return
  }
}

</mosaic_0001>

<llo_original>
// kernel: tpu_custom_call.1
$region0: #{tpu_custom_call.1}
  #allocation0 [shape = 'u32[]', space=smem, size = 0x4, offset = 0x4, fixed_abs, tag = 'smem constant byte address 0x4 - core index']
  #allocation1 [shape = 'u32[144,128]{1,0:T(1,128)}', space=vmem, size = 0x12000, scoped, tag = 'internal scratch']
  #allocation2 [shape = 'f32[16,128]{1,0:T(8,128)}', space=vmem, size = 0x2000, scoped, tag = 'scratch operand']
  #allocation3 [shape = 'f32[8,128]{1,0:T(8,128)}', space=vmem, size = 0x1000, scoped, tag = 'scratch operand']
  #allocation4 [shape = 'f32[8,128]{1,0:T(8,128)}', space=vmem, size = 0x1000, scoped, tag = 'scratch operand']
  %s0 = inlined_call_operand.hbm [shape: s32[16], index: 0, kind: input, shape index: {}]
  %s1 = inlined_call_operand.vmem [shape: s32[16], index: 1, kind: input, shape index: {}]
  %s2 = inlined_call_operand.vmem [shape: s32[2], index: 2, kind: input, shape index: {}]
  %s3 = inlined_call_operand.vmem [shape: s32[2], index: 3, kind: input, shape index: {}]
  %s4 = inlined_call_operand.hbm [shape: f32[16,128], index: 4, kind: input, shape index: {}]
  %s5 = inlined_call_operand.hbm [shape: f32[128,128], index: 5, kind: input, shape index: {}]
  %s6 = inlined_call_operand.hbm [shape: f32[128,128], index: 6, kind: input, shape index: {}]
  %s7 = inlined_call_operand.vmem [shape: f32[1,128], index: 7, kind: input, shape index: {}]
  %s8 = inlined_call_operand.hbm [shape: f32[128,128], index: 8, kind: input, shape index: {}]
  %s9 = inlined_call_operand.vmem [shape: f32[1,128], index: 9, kind: input, shape index: {}]
  %s10 = inlined_call_operand.hbm [shape: f32[16,128], index: 10, kind: output, shape index: {}]
  %s11 = sld [smem:[#allocation0]]
  $region96: #{tpu_custom_call.1} parent=0
    _
  %s13 = ssub.s32 1, %s11
  %s14 = scalar_select 0, %s13, %s11
  $region1: #{tpu_custom_call.1} parent=0
    #allocation5 [shape = 'u8[512]{0}', space=smem, size = 0x200, scoped, tag = 'input window, operand 0, single buffered']
    #allocation6 [shape = 's32[1]{0}', space=sflag, size = 0x4, scoped, tag = 'scoped memory for tpu_custom_call.1']
    #allocation7 [shape = 's32[1]{0}', space=sflag, size = 0x4, scoped, tag = 'scoped memory for tpu_custom_call.1']
    #allocation8 [shape = 's32[1]{0}', space=sflag, size = 0x4, scoped, tag = 'scoped memory for tpu_custom_call.1']
    #allocation9 [shape = 's32[1]{0}', space=sflag, size = 0x4, scoped, tag = 'scoped memory for tpu_custom_call.1']
    #allocation10 [shape = 'u8[512]{0}', space=smem, size = 0x200, scoped, tag = 'input window, operand 1, single buffered']
    #allocation11 [shape = 'u8[512]{0}', space=smem, size = 0x200, scoped, tag = 'input window, operand 2, single buffered']
    #allocation12 [shape = 's32[1]{0}', space=sflag, size = 0x4, scoped, tag = 'scoped memory for tpu_custom_call.1']
    #allocation13 [shape = 'u8[512]{0}', space=smem, size = 0x200, scoped, tag = 'input window, operand 3, single buffered']
    #allocation14 [shape = 'u8[8192]{0}', space=vmem, size = 0x2000, scoped, tag = 'input window, operand 4, single buffered']
    #allocation15 [shape = 'u8[65536]{0}', space=vmem, size = 0x10000, scoped, tag = 'input window, operand 5, single buffered']
    #allocation16 [shape = 's32[1]{0}', space=sflag, size = 0x4, scoped, tag = 'scoped memory for tpu_custom_call.1']
    #allocation17 [shape = 'u8[65536]{0}', space=vmem, size = 0x10000, scoped, tag = 'input window, operand 6, single buffered']
    #allocation18 [shape = 'u8[65536]{0}', space=vmem, size = 0x10000, scoped, tag = 'input window, operand 8, single buffered']
    #allocation19 [shape = 's32[1]{0}', space=sflag, size = 0x4, scoped, tag = 'scoped memory for tpu_custom_call.1']
    #allocation20 [shape = 'u8[8192]{0}', space=vmem, size = 0x2000, scoped, tag = 'output window, operand 0, single buffered']
    %15 = vsyncpa [#allocation8], 0
    %16 = vsyncpa [#allocation9], 0
    %17 = vsyncpa [#allocation12], 0
    %18 = vsyncpa [#allocation6], 0
    %19 = vsyncpa [#allocation16], 0
    %20 = vsyncpa [#allocation19], 0
    %21 = vsyncpa [#allocation7], 0
    // Predicated region
    $region2: #{tpu_custom_call.1} parent=1 // pred_check
      _
    $region3: #{tpu_custom_call.1} parent=1 // pred_check_branch
      %23 = sbr.rel (0) target = $region5
    $region4: #{tpu_custom_call.1} parent=1 // pred_region
      %s25 = ssub.s32 16, 16
      %26 = vsyncadd [#allocation8], %s25
      %29 = dma.hbm_to_smem %s0, 16, [#allocation5], [#allocation8]
    $region5: #{tpu_custom_call.1} parent=1 // pred_fallthru
      _
    // Predicated region
    $region6: #{tpu_custom_call.1} parent=1 // pred_check
      _
    $region7: #{tpu_custom_call.1} parent=1 // pred_check_branch
      %31 = sbr.rel (0) target = $region9
    $region8: #{tpu_custom_call.1} parent=1 // pred_region
      %s33 = ssub.s32 16, 16
      %34 = vsyncadd [#allocation9], %s33
      %s36 = sshll.u32 %s1, 4
      %s37 = int_to_ptr.vmem [resolvable:$true] %s36
      %39 = dma.vmem_to_smem %s37, 16, [#allocation10], [#allocation9]
    $region9: #{tpu_custom_call.1} parent=1 // pred_fallthru
      _
    // Predicated region
    $region10: #{tpu_custom_call.1} parent=1 // pred_check
      _
    $region11: #{tpu_custom_call.1} parent=1 // pred_check_branch
      %41 = sbr.rel (0) target = $region13
    $region12: #{tpu_custom_call.1} parent=1 // pred_region
      %s43 = ssub.s32 16, 16
      %44 = vsyncadd [#allocation12], %s43
      %s46 = sshll.u32 %s2, 4
      %s47 = int_to_ptr.vmem [resolvable:$true] %s46
      %49 = dma.vmem_to_smem %s47, 16, [#allocation11], [#allocation12]
    $region13: #{tpu_custom_call.1} parent=1 // pred_fallthru
      _
    // Predicated region
    $region14: #{tpu_custom_call.1} parent=1 // pred_check
      _
    $region15: #{tpu_custom_call.1} parent=1 // pred_check_branch
      %51 = sbr.rel (0) target = $region17
    $region16: #{tpu_custom_call.1} parent=1 // pred_region
      %s53 = ssub.s32 16, 16
      %54 = vsyncadd [#allocation12], %s53
      %s56 = sshll.u32 %s3, 4
      %s57 = int_to_ptr.vmem [resolvable:$true] %s56
      %59 = dma.vmem_to_smem %s57, 16, [#allocation13], [#allocation12]
    $region17: #{tpu_custom_call.1} parent=1 // pred_fallthru
      _
    // Predicated region
    $region18: #{tpu_custom_call.1} parent=1 // pred_check
      _
    $region19: #{tpu_custom_call.1} parent=1 // pred_check_branch
      %61 = sbr.rel (0) target = $region21
    $region20: #{tpu_custom_call.1} parent=1 // pred_region
      %s63 = ssub.s32 256, 256
      %64 = vsyncadd [#allocation6], %s63
      %s65 = sshll.u32 [#allocation14], 4
      %s66 = int_to_ptr.vmem [resolvable:$true] %s65
      %71 = dma.hbm_to_vmem [thread:$0]  %s4, 256, %s66, [#allocation6], 128, 128, 8
    $region21: #{tpu_custom_call.1} parent=1 // pred_fallthru
      _
    // Predicated region
    $region22: #{tpu_custom_call.1} parent=1 // pred_check
      _
    $region23: #{tpu_custom_call.1} parent=1 // pred_check_branch
      %73 = sbr.rel (0) target = $region25
    $region24: #{tpu_custom_call.1} parent=1 // pred_region
      %s75 = ssub.s32 2048, 2048
      %76 = vsyncadd [#allocation16], %s75
      %s77 = sshll.u32 [#allocation15], 4
      %s78 = int_to_ptr.vmem [resolvable:$true] %s77
      %83 = dma.hbm_to_vmem [thread:$0]  %s5, 2048, %s78, [#allocation16], 128, 128, 8
    $region25: #{tpu_custom_call.1} parent=1 // pred_fallthru
      _
    // Predicated region
    $region26: #{tpu_custom_call.1} parent=1 // pred_check
      _
    $region27: #{tpu_custom_call.1} parent=1 // pred_check_branch
      %85 = sbr.rel (0) target = $region29
    $region28: #{tpu_custom_call.1} parent=1 // pred_region
      %s87 = ssub.s32 2048, 2048
      %88 = vsyncadd [#allocation16], %s87
      %s89 = sshll.u32 [#allocation17], 4
      %s90 = int_to_ptr.vmem [resolvable:$true] %s89
      %95 = dma.hbm_to_vmem [thread:$0]  %s6, 2048, %s90, [#allocation16], 128, 128, 8
    $region29: #{tpu_custom_call.1} parent=1 // pred_fallthru
      _
    // Predicated region
    $region30: #{tpu_custom_call.1} parent=1 // pred_check
      _
    $region31: #{tpu_custom_call.1} parent=1 // pred_check_branch
      %97 = sbr.rel (0) target = $region33
    $region32: #{tpu_custom_call.1} parent=1 // pred_region
      _
    $region33: #{tpu_custom_call.1} parent=1 // pred_fallthru
      _
    // Predicated region
    $region34: #{tpu_custom_call.1} parent=1 // pred_check
      _
    $region35: #{tpu_custom_call.1} parent=1 // pred_check_branch
      %99 = sbr.rel (0) target = $region37
    $region36: #{tpu_custom_call.1} parent=1 // pred_region
      %s101 = ssub.s32 2048, 2048
      %102 = vsyncadd [#allocation19], %s101
      %s103 = sshll.u32 [#allocation18], 4
      %s104 = int_to_ptr.vmem [resolvable:$true] %s103
      %109 = dma.hbm_to_vmem [thread:$0]  %s8, 2048, %s104, [#allocation19], 128, 128, 8
    $region37: #{tpu_custom_call.1} parent=1 // pred_fallthru
      _
    // Predicated region
    $region38: #{tpu_custom_call.1} parent=1 // pred_check
      _
    $region39: #{tpu_custom_call.1} parent=1 // pred_check_branch
      %111 = sbr.rel (0) target = $region41
    $region40: #{tpu_custom_call.1} parent=1 // pred_region
      _
    $region41: #{tpu_custom_call.1} parent=1 // pred_fallthru
      _
    // Predicated region
    $region42: #{tpu_custom_call.1} parent=1 // pred_check
      _
    $region43: #{tpu_custom_call.1} parent=1 // pred_check_branch
      %113 = sbr.rel (0) target = $region45
    $region44: #{tpu_custom_call.1} parent=1 // pred_region
      %114 = dma.done [#allocation8], 16
    $region45: #{tpu_custom_call.1} parent=1 // pred_fallthru
      _
    // Predicated region
    $region46: #{tpu_custom_call.1} parent=1 // pred_check
      _
    $region47: #{tpu_custom_call.1} parent=1 // pred_check_branch
      %116 = sbr.rel (0) target = $region49
    $region48: #{tpu_custom_call.1} parent=1 // pred_region
      %117 = dma.done [#allocation9], 16
    $region49: #{tpu_custom_call.1} parent=1 // pred_fallthru
      _
    // Predicated region
    $region50: #{tpu_custom_call.1} parent=1 // pred_check
      _
    $region51: #{tpu_custom_call.1} parent=1 // pred_check_branch
      %119 = sbr.rel (0) target = $region53
    $region52: #{tpu_custom_call.1} parent=1 // pred_region
      %120 = dma.done [#allocation12], 16
    $region53: #{tpu_custom_call.1} parent=1 // pred_fallthru
      _
    // Predicated region
    $region54: #{tpu_custom_call.1} parent=1 // pred_check
      _
    $region55: #{tpu_custom_call.1} parent=1 // pred_check_branch
      %122 = sbr.rel (0) target = $region57
    $region56: #{tpu_custom_call.1} parent=1 // pred_region
      %123 = dma.done [#allocation12], 16
    $region57: #{tpu_custom_call.1} parent=1 // pred_fallthru
      _
    // Predicated region
    $region58: #{tpu_custom_call.1} parent=1 // pred_check
      _
    $region59: #{tpu_custom_call.1} parent=1 // pred_check_branch
      %125 = sbr.rel (0) target = $region61
    $region60: #{tpu_custom_call.1} parent=1 // pred_region
      %126 = dma.done [#allocation6], 256
    $region61: #{tpu_custom_call.1} parent=1 // pred_fallthru
      _
    // Predicated region
    $region62: #{tpu_custom_call.1} parent=1 // pred_check
      _
    $region63: #{tpu_custom_call.1} parent=1 // pred_check_branch
      %128 = sbr.rel (0) target = $region65
    $region64: #{tpu_custom_call.1} parent=1 // pred_region
      %129 = dma.done [#allocation16], 2048
    $region65: #{tpu_custom_call.1} parent=1 // pred_fallthru
      _
    // Predicated region
    $region66: #{tpu_custom_call.1} parent=1 // pred_check
      _
    $region67: #{tpu_custom_call.1} parent=1 // pred_check_branch
      %131 = sbr.rel (0) target = $region69
    $region68: #{tpu_custom_call.1} parent=1 // pred_region
      %132 = dma.done [#allocation16], 2048
    $region69: #{tpu_custom_call.1} parent=1 // pred_fallthru
      _
    // Predicated region
    $region70: #{tpu_custom_call.1} parent=1 // pred_check
      _
    $region71: #{tpu_custom_call.1} parent=1 // pred_check_branch
      %134 = sbr.rel (0) target = $region73
    $region72: #{tpu_custom_call.1} parent=1 // pred_region
      %135 = dma.done [#allocation19], 2048
    $region73: #{tpu_custom_call.1} parent=1 // pred_fallthru
      _
    %136 = sfence
    %v137 = vld [vmem:[#allocation14] sm:$0xff]
    %v138 = vld [vmem:[#allocation14 + $0x8] sm:$0xff]
    %v139 = vmul.f32 %v137, %v137
    %v140 = vmul.f32 %v138, %v138
    %141 = vadd.xlane.f32.xlu0 %v139
    %v142 = vpop.xlane.xlu0 %141
    %143 = vadd.xlane.f32.xlu0 %v140
    %v144 = vpop.xlane.xlu0 %143
    %v145 = vrsqrt.pop %v142
    %v146 = vrsqrt.pop %v144
    %v147 = vmul.f32 %v137, %v145
    %v148 = vmul.f32 %v138, %v146
    %149 = vst [vmem:[#allocation2] sm:$0xff] %v147
    %150 = vst [vmem:[#allocation2 + $0x8] sm:$0xff] %v148
    %151 = vst [vmem:[#allocation3] sm:$0xff] 0.0
    %152 = vst [vmem:[#allocation4] sm:$0xff] 0.0
    %s153 = sld [smem:[#allocation11]]
    %s154 = sld [smem:[#allocation13]]
    // While loop
    $region74: #{tpu_custom_call.1} parent=1 // loop_pre_header
      _
    $region75: #{tpu_custom_call.1} parent=1 // loop_header
      %s156 = sphi 0, %s158
      %p157 = scmp.ge.s32.totalorder %s156, %s154
    $region76: #{tpu_custom_call.1} parent=1 // loop_header_branch
      %160 = sbr.rel (%p157) target = $region80
    $region77: #{tpu_custom_call.1} parent=1 // loop_body
      %s161 = sadd.s32 %s153, %s156
      %s162 = sld [smem:[#allocation5 + %s161]]
      %s163 = scalar_lea.vmem [#allocation2], %s162
      %v164 = vld [vmem:[%s163] sm:$0x1]
      %s165 = scalar_lea.vmem [#allocation3], %s156
      %166 = vst [vmem:[%s165] sm:$0x1] %v164
      %s167 = sld [smem:[#allocation10 + %s161]]
      %s168 = scalar_lea.vmem [#allocation2], %s167
      %v169 = vld [vmem:[%s168] sm:$0x1]
      %s170 = scalar_lea.vmem [#allocation4], %s156
      %171 = vst [vmem:[%s170] sm:$0x1] %v169
    $region78: #{tpu_custom_call.1} parent=1 // loop_footer
      %s158 = sadd.s32 %s156, 1
    $region79: #{tpu_custom_call.1} parent=1 // loop_footer_branch
      %155 = sbr.rel target = $region75
    $region80: #{tpu_custom_call.1} parent=1 // loop_exit
      _
    %v172 = vld [vmem:[#allocation3] sm:$0xff]
    %v173 = vld [vmem:[#allocation15] sm:$0xff]
    %v174 = vld [vmem:[#allocation15 + $0x8] sm:$0xff]
    %v175 = vld [vmem:[#allocation15 + $0x10] sm:$0xff]
    %v176 = vld [vmem:[#allocation15 + $0x18] sm:$0xff]
    %v177 = vld [vmem:[#allocation15 + $0x20] sm:$0xff]
    %v178 = vld [vmem:[#allocation15 + $0x28] sm:$0xff]
    %v179 = vld [vmem:[#allocation15 + $0x30] sm:$0xff]
    %v180 = vld [vmem:[#allocation15 + $0x38] sm:$0xff]
    %v181 = vld [vmem:[#allocation15 + $0x40] sm:$0xff]
    %v182 = vld [vmem:[#allocation15 + $0x48] sm:$0xff]
    %v183 = vld [vmem:[#allocation15 + $0x50] sm:$0xff]
    %v184 = vld [vmem:[#allocation15 + $0x58] sm:$0xff]
    %v185 = vld [vmem:[#allocation15 + $0x60] sm:$0xff]
    %v186 = vld [vmem:[#allocation15 + $0x68] sm:$0xff]
    %v187 = vld [vmem:[#allocation15 + $0x70] sm:$0xff]
    %v188 = vld [vmem:[#allocation15 + $0x78] sm:$0xff]
    %v189 = vld [vmem:[#allocation4] sm:$0xff]
    %v190 = vld [vmem:[#allocation17] sm:$0xff]
    %v191 = vld [vmem:[#allocation17 + $0x8] sm:$0xff]
    %v192 = vld [vmem:[#allocation17 + $0x10] sm:$0xff]
    %v193 = vld [vmem:[#allocation17 + $0x18] sm:$0xff]
    %v194 = vld [vmem:[#allocation17 + $0x20] sm:$0xff]
    %v195 = vld [vmem:[#allocation17 + $0x28] sm:$0xff]
    %v196 = vld [vmem:[#allocation17 + $0x30] sm:$0xff]
    %v197 = vld [vmem:[#allocation17 + $0x38] sm:$0xff]
    %v198 = vld [vmem:[#allocation17 + $0x40] sm:$0xff]
    %v199 = vld [vmem:[#allocation17 + $0x48] sm:$0xff]
    %v200 = vld [vmem:[#allocation17 + $0x50] sm:$0xff]
    %v201 = vld [vmem:[#allocation17 + $0x58] sm:$0xff]
    %v202 = vld [vmem:[#allocation17 + $0x60] sm:$0xff]
    %v203 = vld [vmem:[#allocation17 + $0x68] sm:$0xff]
    %v204 = vld [vmem:[#allocation17 + $0x70] sm:$0xff]
    %v205 = vld [vmem:[#allocation17 + $0x78] sm:$0xff]
    %206 = vmatprep.subr.mxu0 0.0
    %207 = vmatpush1.msra.mxu0 %v190
    %208 = vmatprep.subr.mxu0 0.0
    %209 = vmatpush1.msra.mxu0 %v191
    %210 = vmatprep.subr.mxu0 0.0
    %211 = vmatpush1.msra.mxu0 %v192
    %212 = vmatprep.subr.mxu0 0.0
    %213 = vmatpush1.msra.mxu0 %v193
    %214 = vmatprep.subr.mxu0 0.0
    %215 = vmatpush1.msra.mxu0 %v194
    %216 = vmatprep.subr.mxu0 0.0
    %217 = vmatpush1.msra.mxu0 %v195
    %218 = vmatprep.subr.mxu0 0.0
    %219 = vmatpush1.msra.mxu0 %v196
    %220 = vmatprep.subr.mxu0 0.0
    %221 = vmatpush1.msra.mxu0 %v197
    %222 = vmatprep.subr.mxu0 0.0
    %223 = vmatpush1.msra.mxu0 %v198
    %224 = vmatprep.subr.mxu0 0.0
    %225 = vmatpush1.msra.mxu0 %v199
    %226 = vmatprep.subr.mxu0 0.0
    %227 = vmatpush1.msra.mxu0 %v200
    %228 = vmatprep.subr.mxu0 0.0
    %229 = vmatpush1.msra.mxu0 %v201
    %230 = vmatprep.subr.mxu0 0.0
    %231 = vmatpush1.msra.mxu0 %v202
    %232 = vmatprep.subr.mxu0 0.0
    %233 = vmatpush1.msra.mxu0 %v203
    %234 = vmatprep.subr.mxu0 0.0
    %235 = vmatpush1.msra.mxu0 %v204
    %236 = vmatprep.subr.mxu0 0.0
    %237 = vmatpush1.msra.mxu0 %v205
    %238 = vmatprep.subr.mxu0 0.0
    %239 = vmatpush1.msra.mxu0 0.0
    %240 = vmatprep.subr.mxu0 0.0
    %241 = vmatpush1.msra.mxu0 0.0
    %242 = vmatprep.subr.mxu0 0.0
    %243 = vmatpush1.msra.mxu0 0.0
    %244 = vmatprep.subr.mxu0 0.0
    %245 = vmatpush1.msra.mxu0 0.0
    %246 = vmatprep.subr.mxu0 0.0
    %247 = vmatpush1.msra.mxu0 0.0
    %248 = vmatprep.subr.mxu0 0.0
    %249 = vmatpush1.msra.mxu0 0.0
    %250 = vmatprep.subr.mxu0 0.0
    %251 = vmatpush1.msra.mxu0 0.0
    %252 = vmatprep.subr.mxu0 0.0
    %253 = vmatpush1.msra.mxu0 0.0
    %254 = vmatprep.subr.mxu0 0.0
    %255 = vmatpush1.msra.mxu0 0.0
    %256 = vmatprep.subr.mxu0 0.0
    %257 = vmatpush1.msra.mxu0 0.0
    %258 = vmatprep.subr.mxu0 0.0
    %259 = vmatpush1.msra.mxu0 0.0
    %260 = vmatprep.subr.mxu0 0.0
    %261 = vmatpush1.msra.mxu0 0.0
    %262 = vmatprep.subr.mxu0 0.0
    %263 = vmatpush1.msra.mxu0 0.0
    %264 = vmatprep.subr.mxu0 0.0
    %265 = vmatpush1.msra.mxu0 0.0
    %266 = vmatprep.subr.mxu0 0.0
    %267 = vmatpush1.msra.mxu0 0.0
    %268 = vmatprep.subr.mxu0 0.0
    %269 = vmatpush1.msra.mxu0 0.0
    %270 = vmatprep.mubr.f32.mxu0 0.0
    %271 = vmatmul.mubr.f32.gmra.mrb[0].mxu0 %v189
    %v272 = vpop.f32.mrb[0].mxu0
    %v273 = vadd.f32 0.0, %v272
    %v274 = vpop.f32.mrb[0].mxu0
    %275 = vdwg.mxu0
    %276 = vmatprep.subr.mxu0 0.0
    %277 = vmatpush1.msra.mxu0 %v173
    %278 = vmatprep.subr.mxu0 0.0
    %279 = vmatpush1.msra.mxu0 %v174
    %280 = vmatprep.subr.mxu0 0.0
    %281 = vmatpush1.msra.mxu0 %v175
    %282 = vmatprep.subr.mxu0 0.0
    %283 = vmatpush1.msra.mxu0 %v176
    %284 = vmatprep.subr.mxu0 0.0
    %285 = vmatpush1.msra.mxu0 %v177
    %286 = vmatprep.subr.mxu0 0.0
    %287 = vmatpush1.msra.mxu0 %v178
    %288 = vmatprep.subr.mxu0 0.0
    %289 = vmatpush1.msra.mxu0 %v179
    %290 = vmatprep.subr.mxu0 0.0
    %291 = vmatpush1.msra.mxu0 %v180
    %292 = vmatprep.subr.mxu0 0.0
    %293 = vmatpush1.msra.mxu0 %v181
    %294 = vmatprep.subr.mxu0 0.0
    %295 = vmatpush1.msra.mxu0 %v182
    %296 = vmatprep.subr.mxu0 0.0
    %297 = vmatpush1.msra.mxu0 %v183
    %298 = vmatprep.subr.mxu0 0.0
    %299 = vmatpush1.msra.mxu0 %v184
    %300 = vmatprep.subr.mxu0 0.0
    %301 = vmatpush1.msra.mxu0 %v185
    %302 = vmatprep.subr.mxu0 0.0
    %303 = vmatpush1.msra.mxu0 %v186
    %304 = vmatprep.subr.mxu0 0.0
    %305 = vmatpush1.msra.mxu0 %v187
    %306 = vmatprep.subr.mxu0 0.0
    %307 = vmatpush1.msra.mxu0 %v188
    %308 = vmatprep.subr.mxu0 0.0
    %309 = vmatpush1.msra.mxu0 0.0
    %310 = vmatprep.subr.mxu0 0.0
    %311 = vmatpush1.msra.mxu0 0.0
    %312 = vmatprep.subr.mxu0 0.0
    %313 = vmatpush1.msra.mxu0 0.0
    %314 = vmatprep.subr.mxu0 0.0
    %315 = vmatpush1.msra.mxu0 0.0
    %316 = vmatprep.subr.mxu0 0.0
    %317 = vmatpush1.msra.mxu0 0.0
    %318 = vmatprep.subr.mxu0 0.0
    %319 = vmatpush1.msra.mxu0 0.0
    %320 = vmatprep.subr.mxu0 0.0
    %321 = vmatpush1.msra.mxu0 0.0
    %322 = vmatprep.subr.mxu0 0.0
    %323 = vmatpush1.msra.mxu0 0.0
    %324 = vmatprep.subr.mxu0 0.0
    %325 = vmatpush1.msra.mxu0 0.0
    %326 = vmatprep.subr.mxu0 0.0
    %327 = vmatpush1.msra.mxu0 0.0
    %328 = vmatprep.subr.mxu0 0.0
    %329 = vmatpush1.msra.mxu0 0.0
    %330 = vmatprep.subr.mxu0 0.0
    %331 = vmatpush1.msra.mxu0 0.0
    %332 = vmatprep.subr.mxu0 0.0
    %333 = vmatpush1.msra.mxu0 0.0
    %334 = vmatprep.subr.mxu0 0.0
    %335 = vmatpush1.msra.mxu0 0.0
    %336 = vmatprep.subr.mxu0 0.0
    %337 = vmatpush1.msra.mxu0 0.0
    %338 = vmatprep.subr.mxu0 0.0
    %339 = vmatpush1.msra.mxu0 0.0
    %340 = vmatprep.mubr.f32.mxu0 0.0
    %341 = vmatmul.mubr.f32.gmra.mrb[0].mxu0 %v172
    %v342 = vpop.f32.mrb[0].mxu0
    %v343 = vadd.f32 %v273, %v342
    %v344 = vpop.f32.mrb[0].mxu0
    %345 = vdwg.mxu0
    %v346 = vld [vmem:[%s7] sm:$0x1]
    %v348 = vlaneseq
    %v349 = vshrl.u32 %v348, 7
    %v350 = vsub.s32 0, %v349
    %v351 = vrot.slane %v346, %v350
    %v353 = vadd.f32 %v343, %v351
    %v354 = vtanh.pop %v353
    %v355 = vmul.f32 %v354, %v354
    %356 = vadd.xlane.f32.xlu0 %v355
    %v357 = vpop.xlane.xlu0 %356
    %v358 = vrsqrt.pop %v357
    %v359 = vmul.f32 %v354, %v358
    %s360 = scalar_lea.vmem [#allocation2], %s153
    %361 = vst [vmem:[%s360] sm:$0xff] %v359
    %s362 = sld [smem:[#allocation11 + $0x1]]
    %s363 = sld [smem:[#allocation13 + $0x1]]
    // While loop
    $region81: #{tpu_custom_call.1} parent=1 // loop_pre_header
      _
    $region82: #{tpu_custom_call.1} parent=1 // loop_header
      %s365 = sphi 0, %s367
      %p366 = scmp.ge.s32.totalorder %s365, %s363
    $region83: #{tpu_custom_call.1} parent=1 // loop_header_branch
      %369 = sbr.rel (%p366) target = $region87
    $region84: #{tpu_custom_call.1} parent=1 // loop_body
      %s370 = sadd.s32 %s362, %s365
      %s371 = sld [smem:[#allocation5 + %s370]]
      %s372 = scalar_lea.vmem [#allocation2], %s371
      %v373 = vld [vmem:[%s372] sm:$0x1]
      %s374 = scalar_lea.vmem [#allocation3], %s365
      %375 = vst [vmem:[%s374] sm:$0x1] %v373
      %s376 = sld [smem:[#allocation10 + %s370]]
      %s377 = scalar_lea.vmem [#allocation2], %s376
      %v378 = vld [vmem:[%s377] sm:$0x1]
      %s379 = scalar_lea.vmem [#allocation4], %s365
      %380 = vst [vmem:[%s379] sm:$0x1] %v378
    $region85: #{tpu_custom_call.1} parent=1 // loop_footer
      %s367 = sadd.s32 %s365, 1
    $region86: #{tpu_custom_call.1} parent=1 // loop_footer_branch
      %364 = sbr.rel target = $region82
    $region87: #{tpu_custom_call.1} parent=1 // loop_exit
      _
    %v381 = vld [vmem:[#allocation3] sm:$0xff]
    %v382 = vld [vmem:[#allocation15] sm:$0xff]
    %v383 = vld [vmem:[#allocation15 + $0x8] sm:$0xff]
    %v384 = vld [vmem:[#allocation15 + $0x10] sm:$0xff]
    %v385 = vld [vmem:[#allocation15 + $0x18] sm:$0xff]
    %v386 = vld [vmem:[#allocation15 + $0x20] sm:$0xff]
    %v387 = vld [vmem:[#allocation15 + $0x28] sm:$0xff]
    %v388 = vld [vmem:[#allocation15 + $0x30] sm:$0xff]
    %v389 = vld [vmem:[#allocation15 + $0x38] sm:$0xff]
    %v390 = vld [vmem:[#allocation15 + $0x40] sm:$0xff]
    %v391 = vld [vmem:[#allocation15 + $0x48] sm:$0xff]
    %v392 = vld [vmem:[#allocation15 + $0x50] sm:$0xff]
    %v393 = vld [vmem:[#allocation15 + $0x58] sm:$0xff]
    %v394 = vld [vmem:[#allocation15 + $0x60] sm:$0xff]
    %v395 = vld [vmem:[#allocation15 + $0x68] sm:$0xff]
    %v396 = vld [vmem:[#allocation15 + $0x70] sm:$0xff]
    %v397 = vld [vmem:[#allocation15 + $0x78] sm:$0xff]
    %v398 = vld [vmem:[#allocation4] sm:$0xff]
    %v399 = vld [vmem:[#allocation17] sm:$0xff]
    %v400 = vld [vmem:[#allocation17 + $0x8] sm:$0xff]
    %v401 = vld [vmem:[#allocation17 + $0x10] sm:$0xff]
    %v402 = vld [vmem:[#allocation17 + $0x18] sm:$0xff]
    %v403 = vld [vmem:[#allocation17 + $0x20] sm:$0xff]
    %v404 = vld [vmem:[#allocation17 + $0x28] sm:$0xff]
    %v405 = vld [vmem:[#allocation17 + $0x30] sm:$0xff]
    %v406 = vld [vmem:[#allocation17 + $0x38] sm:$0xff]
    %v407 = vld [vmem:[#allocation17 + $0x40] sm:$0xff]
    %v408 = vld [vmem:[#allocation17 + $0x48] sm:$0xff]
    %v409 = vld [vmem:[#allocation17 + $0x50] sm:$0xff]
    %v410 = vld [vmem:[#allocation17 + $0x58] sm:$0xff]
    %v411 = vld [vmem:[#allocation17 + $0x60] sm:$0xff]
    %v412 = vld [vmem:[#allocation17 + $0x68] sm:$0xff]
    %v413 = vld [vmem:[#allocation17 + $0x70] sm:$0xff]
    %v414 = vld [vmem:[#allocation17 + $0x78] sm:$0xff]
    %415 = vmatprep.subr.mxu0 0.0
    %416 = vmatpush1.msra.mxu0 %v399
    %417 = vmatprep.subr.mxu0 0.0
    %418 = vmatpush1.msra.mxu0 %v400
    %419 = vmatprep.subr.mxu0 0.0
    %420 = vmatpush1.msra.mxu0 %v401
    %421 = vmatprep.subr.mxu0 0.0
    %422 = vmatpush1.msra.mxu0 %v402
    %423 = vmatprep.subr.mxu0 0.0
    %424 = vmatpush1.msra.mxu0 %v403
    %425 = vmatprep.subr.mxu0 0.0
    %426 = vmatpush1.msra.mxu0 %v404
    %427 = vmatprep.subr.mxu0 0.0
    %428 = vmatpush1.msra.mxu0 %v405
    %429 = vmatprep.subr.mxu0 0.0
    %430 = vmatpush1.msra.mxu0 %v406
    %431 = vmatprep.subr.mxu0 0.0
    %432 = vmatpush1.msra.mxu0 %v407
    %433 = vmatprep.subr.mxu0 0.0
    %434 = vmatpush1.msra.mxu0 %v408
    %435 = vmatprep.subr.mxu0 0.0
    %436 = vmatpush1.msra.mxu0 %v409
    %437 = vmatprep.subr.mxu0 0.0
    %438 = vmatpush1.msra.mxu0 %v410
    %439 = vmatprep.subr.mxu0 0.0
    %440 = vmatpush1.msra.mxu0 %v411
    %441 = vmatprep.subr.mxu0 0.0
    %442 = vmatpush1.msra.mxu0 %v412
    %443 = vmatprep.subr.mxu0 0.0
    %444 = vmatpush1.msra.mxu0 %v413
    %445 = vmatprep.subr.mxu0 0.0
    %446 = vmatpush1.msra.mxu0 %v414
    %447 = vmatprep.subr.mxu0 0.0
    %448 = vmatpush1.msra.mxu0 0.0
    %449 = vmatprep.subr.mxu0 0.0
    %450 = vmatpush1.msra.mxu0 0.0
    %451 = vmatprep.subr.mxu0 0.0
    %452 = vmatpush1.msra.mxu0 0.0
    %453 = vmatprep.subr.mxu0 0.0
    %454 = vmatpush1.msra.mxu0 0.0
    %455 = vmatprep.subr.mxu0 0.0
    %456 = vmatpush1.msra.mxu0 0.0
    %457 = vmatprep.subr.mxu0 0.0
    %458 = vmatpush1.msra.mxu0 0.0
    %459 = vmatprep.subr.mxu0 0.0
    %460 = vmatpush1.msra.mxu0 0.0
    %461 = vmatprep.subr.mxu0 0.0
    %462 = vmatpush1.msra.mxu0 0.0
    %463 = vmatprep.subr.mxu0 0.0
    %464 = vmatpush1.msra.mxu0 0.0
    %465 = vmatprep.subr.mxu0 0.0
    %466 = vmatpush1.msra.mxu0 0.0
    %467 = vmatprep.subr.mxu0 0.0
    %468 = vmatpush1.msra.mxu0 0.0
    %469 = vmatprep.subr.mxu0 0.0
    %470 = vmatpush1.msra.mxu0 0.0
    %471 = vmatprep.subr.mxu0 0.0
    %472 = vmatpush1.msra.mxu0 0.0
    %473 = vmatprep.subr.mxu0 0.0
    %474 = vmatpush1.msra.mxu0 0.0
    %475 = vmatprep.subr.mxu0 0.0
    %476 = vmatpush1.msra.mxu0 0.0
    %477 = vmatprep.subr.mxu0 0.0
    %478 = vmatpush1.msra.mxu0 0.0
    %479 = vmatprep.mubr.f32.mxu0 0.0
    %480 = vmatmul.mubr.f32.gmra.mrb[0].mxu0 %v398
    %v481 = vpop.f32.mrb[0].mxu0
    %v482 = vadd.f32 0.0, %v481
    %v483 = vpop.f32.mrb[0].mxu0
    %484 = vdwg.mxu0
    %485 = vmatprep.subr.mxu0 0.0
    %486 = vmatpush1.msra.mxu0 %v382
    %487 = vmatprep.subr.mxu0 0.0
    %488 = vmatpush1.msra.mxu0 %v383
    %489 = vmatprep.subr.mxu0 0.0
    %490 = vmatpush1.msra.mxu0 %v384
    %491 = vmatprep.subr.mxu0 0.0
    %492 = vmatpush1.msra.mxu0 %v385
    %493 = vmatprep.subr.mxu0 0.0
    %494 = vmatpush1.msra.mxu0 %v386
    %495 = vmatprep.subr.mxu0 0.0
    %496 = vmatpush1.msra.mxu0 %v387
    %497 = vmatprep.subr.mxu0 0.0
    %498 = vmatpush1.msra.mxu0 %v388
    %499 = vmatprep.subr.mxu0 0.0
    %500 = vmatpush1.msra.mxu0 %v389
    %501 = vmatprep.subr.mxu0 0.0
    %502 = vmatpush1.msra.mxu0 %v390
    %503 = vmatprep.subr.mxu0 0.0
    %504 = vmatpush1.msra.mxu0 %v391
    %505 = vmatprep.subr.mxu0 0.0
    %506 = vmatpush1.msra.mxu0 %v392
    %507 = vmatprep.subr.mxu0 0.0
    %508 = vmatpush1.msra.mxu0 %v393
    %509 = vmatprep.subr.mxu0 0.0
    %510 = vmatpush1.msra.mxu0 %v394
    %511 = vmatprep.subr.mxu0 0.0
    %512 = vmatpush1.msra.mxu0 %v395
    %513 = vmatprep.subr.mxu0 0.0
    %514 = vmatpush1.msra.mxu0 %v396
    %515 = vmatprep.subr.mxu0 0.0
    %516 = vmatpush1.msra.mxu0 %v397
    %517 = vmatprep.subr.mxu0 0.0
    %518 = vmatpush1.msra.mxu0 0.0
    %519 = vmatprep.subr.mxu0 0.0
    %520 = vmatpush1.msra.mxu0 0.0
    %521 = vmatprep.subr.mxu0 0.0
    %522 = vmatpush1.msra.mxu0 0.0
    %523 = vmatprep.subr.mxu0 0.0
    %524 = vmatpush1.msra.mxu0 0.0
    %525 = vmatprep.subr.mxu0 0.0
    %526 = vmatpush1.msra.mxu0 0.0
    %527 = vmatprep.subr.mxu0 0.0
    %528 = vmatpush1.msra.mxu0 0.0
    %529 = vmatprep.subr.mxu0 0.0
    %530 = vmatpush1.msra.mxu0 0.0
    %531 = vmatprep.subr.mxu0 0.0
    %532 = vmatpush1.msra.mxu0 0.0
    %533 = vmatprep.subr.mxu0 0.0
    %534 = vmatpush1.msra.mxu0 0.0
    %535 = vmatprep.subr.mxu0 0.0
    %536 = vmatpush1.msra.mxu0 0.0
    %537 = vmatprep.subr.mxu0 0.0
    %538 = vmatpush1.msra.mxu0 0.0
    %539 = vmatprep.subr.mxu0 0.0
    %540 = vmatpush1.msra.mxu0 0.0
    %541 = vmatprep.subr.mxu0 0.0
    %542 = vmatpush1.msra.mxu0 0.0
    %543 = vmatprep.subr.mxu0 0.0
    %544 = vmatpush1.msra.mxu0 0.0
    %545 = vmatprep.subr.mxu0 0.0
    %546 = vmatpush1.msra.mxu0 0.0
    %547 = vmatprep.subr.mxu0 0.0
    %548 = vmatpush1.msra.mxu0 0.0
    %549 = vmatprep.mubr.f32.mxu0 0.0
    %550 = vmatmul.mubr.f32.gmra.mrb[0].mxu0 %v381
    %v551 = vpop.f32.mrb[0].mxu0
    %v552 = vadd.f32 %v482, %v551
    %v553 = vpop.f32.mrb[0].mxu0
    %554 = vdwg.mxu0
    %v555 = vld [vmem:[%s7] sm:$0x1]
    %v557 = vlaneseq
    %v558 = vshrl.u32 %v557, 7
    %v559 = vsub.s32 0, %v558
    %v560 = vrot.slane %v555, %v559
    %v562 = vadd.f32 %v552, %v560
    %v563 = vtanh.pop %v562
    %v564 = vmul.f32 %v563, %v563
    %565 = vadd.xlane.f32.xlu0 %v564
    %v566 = vpop.xlane.xlu0 %565
    %v567 = vrsqrt.pop %v566
    %v568 = vmul.f32 %v563, %v567
    %s569 = scalar_lea.vmem [#allocation2], %s362
    %570 = vst [vmem:[%s569] sm:$0xff] %v568
    %v571 = vld [vmem:[#allocation2] sm:$0xff]
    %v572 = vld [vmem:[#allocation2 + $0x8] sm:$0xff]
    %v573 = vld [vmem:[#allocation18] sm:$0xff]
    %v574 = vld [vmem:[#allocation18 + $0x8] sm:$0xff]
    %v575 = vld [vmem:[#allocation18 + $0x10] sm:$0xff]
    %v576 = vld [vmem:[#allocation18 + $0x18] sm:$0xff]
    %v577 = vld [vmem:[#allocation18 + $0x20] sm:$0xff]
    %v578 = vld [vmem:[#allocation18 + $0x28] sm:$0xff]
    %v579 = vld [vmem:[#allocation18 + $0x30] sm:$0xff]
    %v580 = vld [vmem:[#allocation18 + $0x38] sm:$0xff]
    %v581 = vld [vmem:[#allocation18 + $0x40] sm:$0xff]
    %v582 = vld [vmem:[#allocation18 + $0x48] sm:$0xff]
    %v583 = vld [vmem:[#allocation18 + $0x50] sm:$0xff]
    %v584 = vld [vmem:[#allocation18 + $0x58] sm:$0xff]
    %v585 = vld [vmem:[#allocation18 + $0x60] sm:$0xff]
    %v586 = vld [vmem:[#allocation18 + $0x68] sm:$0xff]
    %v587 = vld [vmem:[#allocation18 + $0x70] sm:$0xff]
    %v588 = vld [vmem:[#allocation18 + $0x78] sm:$0xff]
    %v589 = vld [vmem:[%s9] sm:$0x1]
    %v591 = vlaneseq
    %v592 = vshrl.u32 %v591, 7
    %v593 = vsub.s32 0, %v592
    %v594 = vrot.slane %v589, %v593
    %596 = vmatprep.subr.mxu0 0.0
    %597 = vmatpush1.msra.mxu0 %v573
    %598 = vmatprep.subr.mxu0 0.0
    %599 = vmatpush1.msra.mxu0 %v574
    %600 = vmatprep.subr.mxu0 0.0
    %601 = vmatpush1.msra.mxu0 %v575
    %602 = vmatprep.subr.mxu0 0.0
    %603 = vmatpush1.msra.mxu0 %v576
    %604 = vmatprep.subr.mxu0 0.0
    %605 = vmatpush1.msra.mxu0 %v577
    %606 = vmatprep.subr.mxu0 0.0
    %607 = vmatpush1.msra.mxu0 %v578
    %608 = vmatprep.subr.mxu0 0.0
    %609 = vmatpush1.msra.mxu0 %v579
    %610 = vmatprep.subr.mxu0 0.0
    %611 = vmatpush1.msra.mxu0 %v580
    %612 = vmatprep.subr.mxu0 0.0
    %613 = vmatpush1.msra.mxu0 %v581
    %614 = vmatprep.subr.mxu0 0.0
    %615 = vmatpush1.msra.mxu0 %v582
    %616 = vmatprep.subr.mxu0 0.0
    %617 = vmatpush1.msra.mxu0 %v583
    %618 = vmatprep.subr.mxu0 0.0
    %619 = vmatpush1.msra.mxu0 %v584
    %620 = vmatprep.subr.mxu0 0.0
    %621 = vmatpush1.msra.mxu0 %v585
    %622 = vmatprep.subr.mxu0 0.0
    %623 = vmatpush1.msra.mxu0 %v586
    %624 = vmatprep.subr.mxu0 0.0
    %625 = vmatpush1.msra.mxu0 %v587
    %626 = vmatprep.subr.mxu0 0.0
    %627 = vmatpush1.msra.mxu0 %v588
    %628 = vmatprep.subr.mxu0 0.0
    %629 = vmatpush1.msra.mxu0 0.0
    %630 = vmatprep.subr.mxu0 0.0
    %631 = vmatpush1.msra.mxu0 0.0
    %632 = vmatprep.subr.mxu0 0.0
    %633 = vmatpush1.msra.mxu0 0.0
    %634 = vmatprep.subr.mxu0 0.0
    %635 = vmatpush1.msra.mxu0 0.0
    %636 = vmatprep.subr.mxu0 0.0
    %637 = vmatpush1.msra.mxu0 0.0
    %638 = vmatprep.subr.mxu0 0.0
    %639 = vmatpush1.msra.mxu0 0.0
    %640 = vmatprep.subr.mxu0 0.0
    %641 = vmatpush1.msra.mxu0 0.0
    %642 = vmatprep.subr.mxu0 0.0
    %643 = vmatpush1.msra.mxu0 0.0
    %644 = vmatprep.subr.mxu0 0.0
    %645 = vmatpush1.msra.mxu0 0.0
    %646 = vmatprep.subr.mxu0 0.0
    %647 = vmatpush1.msra.mxu0 0.0
    %648 = vmatprep.subr.mxu0 0.0
    %649 = vmatpush1.msra.mxu0 0.0
    %650 = vmatprep.subr.mxu0 0.0
    %651 = vmatpush1.msra.mxu0 0.0
    %652 = vmatprep.subr.mxu0 0.0
    %653 = vmatpush1.msra.mxu0 0.0
    %654 = vmatprep.subr.mxu0 0.0
    %655 = vmatpush1.msra.mxu0 0.0
    %656 = vmatprep.subr.mxu0 0.0
    %657 = vmatpush1.msra.mxu0 0.0
    %658 = vmatprep.subr.mxu0 0.0
    %659 = vmatpush1.msra.mxu0 0.0
    %660 = vmatprep.mubr.f32.mxu0 0.0
    %661 = vmatmul.mubr.f32.gmra.mrb[0].mxu0 %v571
    %v662 = vpop.f32.mrb[0].mxu0
    %v663 = vadd.f32 %v594, %v662
    %v664 = vpop.f32.mrb[0].mxu0
    %665 = vmatprep.mubr.f32.mxu0 0.0
    %666 = vmatmul.mubr.f32.gmra.mrb[0].mxu0 %v572
    %v667 = vpop.f32.mrb[0].mxu0
    %v668 = vadd.f32 %v594, %v667
    %v669 = vpop.f32.mrb[0].mxu0
    %670 = vdwg.mxu0
    %671 = vst [vmem:[#allocation20] sm:$0xff] %v663
    %672 = vst [vmem:[#allocation20 + $0x8] sm:$0xff] %v668
    // Predicated region
    $region88: #{tpu_custom_call.1} parent=1 // pred_check
      _
    $region89: #{tpu_custom_call.1} parent=1 // pred_check_branch
      %674 = sbr.rel (0) target = $region91
    $region90: #{tpu_custom_call.1} parent=1 // pred_region
      %s676 = ssub.s32 256, 256
      %677 = vsyncadd [#allocation7], %s676
      %s678 = sshll.u32 [#allocation20], 4
      %s679 = int_to_ptr.vmem [resolvable:$true] %s678
      %684 = dma.vmem_to_hbm [thread:$0]  %s679, 256, %s10, [#allocation7], 128, 128, 8
    $region91: #{tpu_custom_call.1} parent=1 // pred_fallthru
      _
    // Predicated region
    $region92: #{tpu_custom_call.1} parent=1 // pred_check
      _
    $region93: #{tpu_custom_call.1} parent=1 // pred_check_branch
      %686 = sbr.rel (0) target = $region95
    $region94: #{tpu_custom_call.1} parent=1 // pred_region
      %687 = dma.done [#allocation7], 256
    $region95: #{tpu_custom_call.1} parent=1 // pred_fallthru
      _
    %688 = vsyncpa [#allocation6], 1
    %689 = vsyncpa [#allocation16], 1
    %690 = vsyncpa [#allocation19], 1
    %691 = vsyncpa [#allocation7], 1
    %692 = vsyncpa [#allocation8], 1
    %693 = vsyncpa [#allocation9], 1
    %694 = vsyncpa [#allocation12], 1

</llo_original>
